<compile_context>
chip_gen: v6e
topology: v6e:2x2x1
jax: 0.10.0
libtpu: 0.0.40
codegen_flags: <defaults>
</compile_context>

<pallas_src>
import jax
import jax.numpy as jnp
import numpy as np
from jax.experimental import pallas as pl
from jax.experimental.pallas import tpu as pltpu


def _round_up(x, m):
    return (x + m - 1) // m * m


# Conservative per-buffer budget for a VMEM-resident table chunk.  Safe on all
# generations (v7x has only 64 MiB physical VMEM per TensorCore, ~32 MiB scoped
# default; v5e/v6e have 128 MiB).
_TABLE_RESIDENT_BUDGET = 8 * 1024 * 1024   # bytes
_VMEM_LIMIT_CAP = 48 * 1024 * 1024         # keep below v7x physical VMEM


def language_embedding_forward(sentences, embed_table, prepend_zero=True):
    """sentences: (seq_len, batch) int32 token ids; embed_table: (vocab, in_dim1)."""
    seq_len, batch = sentences.shape
    vocab, d = embed_table.shape
    out_dtype = embed_table.dtype
    tbl_dtype = embed_table.dtype
    itemsize = jnp.dtype(tbl_dtype).itemsize

    # --- token stream: heading zero row becomes `batch` sentinel ids (-1) --------
    ids = sentences.reshape(-1).astype(jnp.int32)          # row-major (seq, batch)
    if prepend_zero:
        ids = jnp.concatenate([jnp.full((batch,), -1, jnp.int32), ids])
    n_tokens = ids.shape[0]
    out_rows = seq_len + (1 if prepend_zero else 0)

    # --- tiling choices -----------------------------------------------------------
    d_pad = _round_up(d, 128)                               # lane-dense output / MXU N
    vocab_pad = _round_up(vocab, 128)

    TB = min(256, _round_up(n_tokens, 8))                   # tokens per grid step
    n_tiles = -(-n_tokens // TB)
    n_tok_pad = n_tiles * TB

    chunk_bytes_full = vocab_pad * d_pad * itemsize
    if chunk_bytes_full <= _TABLE_RESIDENT_BUDGET:
        VC = vocab_pad                                       # single resident chunk
        n_chunks = 1
    else:
        VC = 512                                             # multiple of 128/256
        vocab_pad = _round_up(vocab, VC)
        n_chunks = vocab_pad // VC

    # padded token ids: -1 sentinel matches no vocab row -> zero rows (discarded)
    ids_col = jnp.pad(ids, (0, n_tok_pad - n_tokens),
                      constant_values=-1).reshape(n_tok_pad, 1)

    table_p = embed_table
    if vocab_pad != vocab or d_pad != d:
        table_p = jnp.pad(embed_table, ((0, vocab_pad - vocab), (0, d_pad - d)))

    # --- VMEM budget / limit --------------------------------------------------------
    out_itemsize = jnp.dtype(out_dtype).itemsize
    need = (2 * VC * d_pad * itemsize          # table chunk (double-buffered)
            + 2 * TB * 4                       # token-id tiles
            + 2 * TB * d_pad * out_itemsize    # output tiles
            + TB * d_pad * 4                   # f32 accumulator scratch
            + TB * VC * itemsize)              # one-hot temp
    vmem_limit = int(min(max(2 * need, 32 * 1024 * 1024), _VMEM_LIMIT_CAP))

    # --- kernels ----------------------------------------------------------------------
    if n_chunks == 1:
        def embed_kernel(ids_ref, table_ref, out_ref):
            # ids_ref   : (TB, 1)        int32 token ids for this token tile
            # table_ref : (VC, d_pad)    full (padded) table, VMEM-resident (constant map)
            # out_ref   : (TB, d_pad)    output tile
            ids_tile = ids_ref[...]                                          # (TB, 1)
            local_v = jax.lax.broadcasted_iota(jnp.int32, (TB, VC), 1)
            onehot = (ids_tile == local_v).astype(tbl_dtype)                 # exact 0/1
            out_ref[...] = jnp.dot(
                onehot, table_ref[...], preferred_element_type=jnp.float32
            ).astype(out_ref.dtype)

        grid = (n_tiles,)
        in_specs = [
            pl.BlockSpec((TB, 1), lambda t: (t, 0)),          # token-id tile
            pl.BlockSpec((VC, d_pad), lambda t: (0, 0)),      # resident table (constant)
        ]
        out_specs = pl.BlockSpec((TB, d_pad), lambda t: (t, 0))
        scratch_shapes = []
        dim_sem = ("parallel",)
    else:
        def embed_kernel(ids_ref, table_ref, out_ref, acc_ref):
            # ids_ref   : (TB, 1)        int32 token ids for this token tile
            # table_ref : (VC, d_pad)    table vocab chunk
            # out_ref   : (TB, d_pad)    output tile (written once, on last chunk)
            # acc_ref   : (TB, d_pad) f32 accumulator scratch
            c = pl.program_id(1)
            ids_shift = ids_ref[...] - c * VC                                # (TB, 1)
            local_v = jax.lax.broadcasted_iota(jnp.int32, (TB, VC), 1)
            onehot = (ids_shift == local_v).astype(tbl_dtype)
            part = jnp.dot(onehot, table_ref[...],
                           preferred_element_type=jnp.float32)

            @pl.when(c == 0)
            def _():
                acc_ref[...] = part

            @pl.when(c > 0)
            def _():
                acc_ref[...] += part

            @pl.when(c == pl.num_programs(1) - 1)
            def _():
                out_ref[...] = acc_ref[...].astype(out_ref.dtype)

        grid = (n_tiles, n_chunks)
        in_specs = [
            pl.BlockSpec((TB, 1), lambda t, c: (t, 0)),       # token-id tile
            pl.BlockSpec((VC, d_pad), lambda t, c: (c, 0)),   # table vocab chunk
        ]
        out_specs = pl.BlockSpec((TB, d_pad), lambda t, c: (t, 0))
        scratch_shapes = [pltpu.VMEM((TB, d_pad), jnp.float32)]
        dim_sem = ("parallel", "arbitrary")

    grid_spec = pltpu.PrefetchScalarGridSpec(
        num_scalar_prefetch=0,
        grid=grid,
        in_specs=in_specs,
        out_specs=out_specs,
        scratch_shapes=scratch_shapes,
    )

    flat = pl.pallas_call(
        embed_kernel,
        out_shape=jax.ShapeDtypeStruct((n_tok_pad, d_pad), out_dtype),
        grid_spec=grid_spec,
        compiler_params=pltpu.CompilerParams(
            dimension_semantics=dim_sem,
            vmem_limit_bytes=vmem_limit,
        ),
    )(ids_col, table_p)

    return flat[:n_tokens, :d].reshape(out_rows, batch, d)


if __name__ == "__main__":
    # Hyper-params implied by the module (dataset != 'meld' branch): vocab of
    # len(word2id), embedding dim in_dim1; sentences are (seq_len, batch) ids.
    seq_len, batch = 8, 2
    vocab_size, in_dim1 = 32, 32

    key = jax.random.PRNGKey(0)
    k_ids, k_emb = jax.random.split(key)

    sentences = jax.random.randint(k_ids, (seq_len, batch), 0, vocab_size, dtype=jnp.int32)
    # deterministic "nn.Embedding" weight init (synthetic, not a checkpoint)
    embed_table = jax.random.normal(k_emb, (vocab_size, in_dim1), dtype=jnp.float32)

    out = language_embedding_forward(sentences, embed_table, prepend_zero=True)
    out = jax.block_until_ready(out)

    # pure-JAX reference of the PyTorch forward
    ref = embed_table[sentences]                                        # (seq, batch, d)
    ref = jnp.concatenate([jnp.zeros((1, batch, in_dim1), jnp.float32), ref], axis=0)

    assert out.shape == (seq_len + 1, batch, in_dim1), out.shape
    np.testing.assert_allclose(np.asarray(out), np.asarray(ref), rtol=1e-6, atol=1e-6)

    print("KERNEL_OK")
</pallas_src>

<mosaic_0001>
module attributes {stable_mosaic.version = 11 : i64} {
  func.func @embed_kernel(%arg0: i32, %arg1: memref<24x1xi32, #tpu.memory_space<vmem>>, %arg2: memref<128x128xf32, #tpu.memory_space<vmem>>, %arg3: memref<24x128xf32, #tpu.memory_space<vmem>>) attributes {dimension_semantics = [#tpu.dimension_semantics<parallel>], iteration_bounds = array<i64: 1>, scalar_prefetch = 0 : i64, scratch_operands = 0 : i64, tpu.core_type = #tpu.core_type<tc>, window_params = [{transform_indices = @transform_0, window_bounds = array<i64: 24, 1>}, {pipeline_mode = #tpu.pipeline_mode<synchronous>, transform_indices = @transform_1, window_bounds = array<i64: 128, 128>}, {transform_indices = @transform_2, window_bounds = array<i64: 24, 128>}]} {
    %c0 = arith.constant 0 : index
    %c0_0 = arith.constant 0 : index
    %0 = vector.load %arg1[%c0, %c0_0] : memref<24x1xi32, #tpu.memory_space<vmem>>, vector<24x1xi32>
    %1 = tpu.iota {dimensions = array<i32: 1>} : vector<24x128xi32>
    %2 = vector.broadcast %0 : vector<24x1xi32> to vector<24x128xi32>
    %3 = arith.cmpi eq, %2, %1 : vector<24x128xi32>
    %4 = arith.extui %3 : vector<24x128xi1> to vector<24x128xi32>
    %5 = arith.sitofp %4 : vector<24x128xi32> to vector<24x128xf32>
    %c0_1 = arith.constant 0 : index
    %c0_2 = arith.constant 0 : index
    %6 = vector.load %arg2[%c0_1, %c0_2] : memref<128x128xf32, #tpu.memory_space<vmem>>, vector<128x128xf32>
    %cst = arith.constant dense<0.000000e+00> : vector<24x128xf32>
    %7 = tpu.matmul %5, %6, %cst {dimension_numbers = #tpu.dot_dimension_numbers<[1], [0], [0], [1], [0, 0, 1, 1], [], []>} : vector<24x128xf32>, vector<128x128xf32>, vector<24x128xf32> -> vector<24x128xf32>
    %c0_3 = arith.constant 0 : index
    %c0_4 = arith.constant 0 : index
    %8 = vector.load %arg3[%c0_3, %c0_4] : memref<24x128xf32, #tpu.memory_space<vmem>>, vector<24x128xf32>
    tpu.vector_store %arg3[%c0_3, %c0_4], %7 {strides = array<i32>} : memref<24x128xf32, #tpu.memory_space<vmem>>, vector<24x128xf32>,
    return
  }
  func.func @transform_0(%arg0: i32) -> (i32, i32) {
    %c0_i32 = arith.constant 0 : i32
    %c0_i32_0 = arith.constant 0 : i32
    return %arg0, %c0_i32 : i32, i32
  }
  func.func @transform_1(%arg0: i32) -> (i32, i32) {
    %c0_i32 = arith.constant 0 : i32
    %c0_i32_0 = arith.constant 0 : i32
    %c0_i32_1 = arith.constant 0 : i32
    return %c0_i32, %c0_i32_0 : i32, i32
  }
  func.func @transform_2(%arg0: i32) -> (i32, i32) {
    %c0_i32 = arith.constant 0 : i32
    %c0_i32_0 = arith.constant 0 : i32
    return %arg0, %c0_i32 : i32, i32
  }
}

</mosaic_0001>

<llo_original>
// kernel: tpu_custom_call.1
$region0: #{tpu_custom_call.1}
  #allocation0 [shape = 'u32[]', space=smem, size = 0x4, offset = 0x4, fixed_abs, tag = 'smem constant byte address 0x4 - core index']
  #allocation1 [shape = 'u32[144,128]{1,0:T(1,128)}', space=vmem, size = 0x12000, scoped, tag = 'internal scratch']
  %s0 = inlined_call_operand.vmem [shape: s32[24,1], index: 0, kind: input, shape index: {}]
  %s1 = inlined_call_operand.hbm [shape: f32[128,128], index: 1, kind: input, shape index: {}]
  %s2 = inlined_call_operand.hbm [shape: f32[24,128], index: 2, kind: output, shape index: {}]
  %s3 = sld [smem:[#allocation0]]
  $region22: #{tpu_custom_call.1} parent=0
    _
  %s5 = ssub.s32 1, %s3
  %s6 = scalar_select 0, %s5, %s3
  $region1: #{tpu_custom_call.1} parent=0
    #allocation2 [shape = 'u8[65536]{0}', space=vmem, size = 0x10000, scoped, tag = 'input window, operand 1, single buffered']
    #allocation3 [shape = 's32[1]{0}', space=sflag, size = 0x4, scoped, tag = 'scoped memory for tpu_custom_call.1']
    #allocation4 [shape = 's32[1]{0}', space=sflag, size = 0x4, scoped, tag = 'scoped memory for tpu_custom_call.1']
    #allocation5 [shape = 'u8[12288]{0}', space=vmem, size = 0x3000, scoped, tag = 'output window, operand 0, single buffered']
    %7 = vsyncpa [#allocation3], 0
    %8 = vsyncpa [#allocation4], 0
    // Predicated region
    $region2: #{tpu_custom_call.1} parent=1 // pred_check
      _
    $region3: #{tpu_custom_call.1} parent=1 // pred_check_branch
      %10 = sbr.rel (0) target = $region5
    $region4: #{tpu_custom_call.1} parent=1 // pred_region
      _
    $region5: #{tpu_custom_call.1} parent=1 // pred_fallthru
      _
    // Predicated region
    $region6: #{tpu_custom_call.1} parent=1 // pred_check
      _
    $region7: #{tpu_custom_call.1} parent=1 // pred_check_branch
      %12 = sbr.rel (0) target = $region9
    $region8: #{tpu_custom_call.1} parent=1 // pred_region
      %s14 = ssub.s32 2048, 2048
      %15 = vsyncadd [#allocation3], %s14
      %s16 = sshll.u32 [#allocation2], 4
      %s17 = int_to_ptr.vmem [resolvable:$true] %s16
      %22 = dma.hbm_to_vmem [thread:$0]  %s1, 2048, %s17, [#allocation3], 128, 128, 8
    $region9: #{tpu_custom_call.1} parent=1 // pred_fallthru
      _
    // Predicated region
    $region10: #{tpu_custom_call.1} parent=1 // pred_check
      _
    $region11: #{tpu_custom_call.1} parent=1 // pred_check_branch
      %24 = sbr.rel (0) target = $region13
    $region12: #{tpu_custom_call.1} parent=1 // pred_region
      %25 = dma.done [#allocation3], 2048
    $region13: #{tpu_custom_call.1} parent=1 // pred_fallthru
      _
    %v26 = vld [vmem:[%s0] sm:$0xff]
    %v27 = vld [vmem:[%s0 + $0x8] sm:$0xff]
    %v28 = vld [vmem:[%s0 + $0x10] sm:$0xff]
    %v29 = vlaneseq
    %v30 = vand.u32 %v29, 127
    %31 = vset.pattern.permute.xlu0 0
    %32 = vperm.xlu0 %31, %v26
    %v33 = vpop.permute.xlu0 %32
    %34 = vset.pattern.permute.xlu0 0
    %35 = vperm.xlu0 %34, %v27
    %v36 = vpop.permute.xlu0 %35
    %37 = vset.pattern.permute.xlu0 0
    %38 = vperm.xlu0 %37, %v28
    %v39 = vpop.permute.xlu0 %38
    %vm40 = vcmp.eq.s32.totalorder %v33, %v30
    %vm41 = vcmp.eq.s32.totalorder %v36, %v30
    %vm42 = vcmp.eq.s32.totalorder %v39, %v30
    %v43 = vsel %vm40, 1, 0
    %v44 = vsel %vm41, 1, 0
    %v45 = vsel %vm42, 1, 0
    %v46 = vcvt.s32.f32 %v43
    %v47 = vcvt.s32.f32 %v44
    %v48 = vcvt.s32.f32 %v45
    %v49 = vld [vmem:[#allocation2] sm:$0xff]
    %v50 = vld [vmem:[#allocation2 + $0x8] sm:$0xff]
    %v51 = vld [vmem:[#allocation2 + $0x10] sm:$0xff]
    %v52 = vld [vmem:[#allocation2 + $0x18] sm:$0xff]
    %v53 = vld [vmem:[#allocation2 + $0x20] sm:$0xff]
    %v54 = vld [vmem:[#allocation2 + $0x28] sm:$0xff]
    %v55 = vld [vmem:[#allocation2 + $0x30] sm:$0xff]
    %v56 = vld [vmem:[#allocation2 + $0x38] sm:$0xff]
    %v57 = vld [vmem:[#allocation2 + $0x40] sm:$0xff]
    %v58 = vld [vmem:[#allocation2 + $0x48] sm:$0xff]
    %v59 = vld [vmem:[#allocation2 + $0x50] sm:$0xff]
    %v60 = vld [vmem:[#allocation2 + $0x58] sm:$0xff]
    %v61 = vld [vmem:[#allocation2 + $0x60] sm:$0xff]
    %v62 = vld [vmem:[#allocation2 + $0x68] sm:$0xff]
    %v63 = vld [vmem:[#allocation2 + $0x70] sm:$0xff]
    %v64 = vld [vmem:[#allocation2 + $0x78] sm:$0xff]
    %65 = vmatprep.subr.mxu0 0.0
    %66 = vmatpush1.msra.mxu0 %v64
    %67 = vmatprep.subr.mxu0 0.0
    %68 = vmatpush1.msra.mxu0 %v63
    %69 = vmatprep.subr.mxu0 0.0
    %70 = vmatpush1.msra.mxu0 %v62
    %71 = vmatprep.subr.mxu0 0.0
    %72 = vmatpush1.msra.mxu0 %v61
    %73 = vmatprep.subr.mxu0 0.0
    %74 = vmatpush1.msra.mxu0 %v60
    %75 = vmatprep.subr.mxu0 0.0
    %76 = vmatpush1.msra.mxu0 %v59
    %77 = vmatprep.subr.mxu0 0.0
    %78 = vmatpush1.msra.mxu0 %v58
    %79 = vmatprep.subr.mxu0 0.0
    %80 = vmatpush1.msra.mxu0 %v57
    %81 = vmatprep.subr.mxu0 0.0
    %82 = vmatpush1.msra.mxu0 %v56
    %83 = vmatprep.subr.mxu0 0.0
    %84 = vmatpush1.msra.mxu0 %v55
    %85 = vmatprep.subr.mxu0 0.0
    %86 = vmatpush1.msra.mxu0 %v54
    %87 = vmatprep.subr.mxu0 0.0
    %88 = vmatpush1.msra.mxu0 %v53
    %89 = vmatprep.subr.mxu0 0.0
    %90 = vmatpush1.msra.mxu0 %v52
    %91 = vmatprep.subr.mxu0 0.0
    %92 = vmatpush1.msra.mxu0 %v51
    %93 = vmatprep.subr.mxu0 0.0
    %94 = vmatpush1.msra.mxu0 %v50
    %95 = vmatprep.subr.mxu0 0.0
    %96 = vmatpush1.msra.mxu0 %v49
    %97 = vmatprep.subr.mxu0 0.0
    %98 = vmatpush2.msra.mxu0 0.0
    %99 = vmatprep.subr.mxu0 0.0
    %100 = vmatpush2.msra.mxu0 0.0
    %101 = vmatprep.subr.mxu0 0.0
    %102 = vmatpush2.msra.mxu0 0.0
    %103 = vmatprep.subr.mxu0 0.0
    %104 = vmatpush2.msra.mxu0 0.0
    %105 = vmatprep.subr.mxu0 0.0
    %106 = vmatpush2.msra.mxu0 0.0
    %107 = vmatprep.subr.mxu0 0.0
    %108 = vmatpush2.msra.mxu0 0.0
    %109 = vmatprep.subr.mxu0 0.0
    %110 = vmatpush2.msra.mxu0 0.0
    %111 = vmatprep.subr.mxu0 0.0
    %112 = vmatpush2.msra.mxu0 0.0
    %113 = vmatprep.subr.mxu0 0.0
    %114 = vmatpush2.msra.mxu0 0.0
    %115 = vmatprep.subr.mxu0 0.0
    %116 = vmatpush2.msra.mxu0 0.0
    %117 = vmatprep.subr.mxu0 0.0
    %118 = vmatpush2.msra.mxu0 0.0
    %119 = vmatprep.subr.mxu0 0.0
    %120 = vmatpush2.msra.mxu0 0.0
    %121 = vmatprep.subr.mxu0 0.0
    %122 = vmatpush2.msra.mxu0 0.0
    %123 = vmatprep.subr.mxu0 0.0
    %124 = vmatpush2.msra.mxu0 0.0
    %125 = vmatprep.subr.mxu0 0.0
    %126 = vmatpush2.msra.mxu0 0.0
    %127 = vmatprep.subr.mxu0 0.0
    %128 = vmatpush2.msra.mxu0 0.0
    %129 = vmatprep.mubr.f32.mxu0 0.0
    %130 = vmatmul.mubr.f32.gmra.mxu0 %v46
    %v131 = vpop.f32.mrf.mxu0
    %v132 = vadd.f32 0.0, %v131
    %v133 = vpop.f32.mrf.mxu0
    %134 = vmatprep.mubr.f32.mxu0 0.0
    %135 = vmatmul.mubr.f32.gmra.mxu0 %v47
    %v136 = vpop.f32.mrf.mxu0
    %v137 = vadd.f32 0.0, %v136
    %v138 = vpop.f32.mrf.mxu0
    %139 = vmatprep.mubr.f32.mxu0 0.0
    %140 = vmatmul.mubr.f32.gmra.mxu0 %v48
    %v141 = vpop.f32.mrf.mxu0
    %v142 = vadd.f32 0.0, %v141
    %v143 = vpop.f32.mrf.mxu0
    %144 = vdwg.mxu0
    %145 = vst [vmem:[#allocation5] sm:$0xff] %v132
    %146 = vst [vmem:[#allocation5 + $0x8] sm:$0xff] %v137
    %147 = vst [vmem:[#allocation5 + $0x10] sm:$0xff] %v142
    // Predicated region
    $region14: #{tpu_custom_call.1} parent=1 // pred_check
      _
    $region15: #{tpu_custom_call.1} parent=1 // pred_check_branch
      %149 = sbr.rel (0) target = $region17
    $region16: #{tpu_custom_call.1} parent=1 // pred_region
      %s151 = ssub.s32 384, 384
      %152 = vsyncadd [#allocation4], %s151
      %s153 = sshll.u32 [#allocation5], 4
      %s154 = int_to_ptr.vmem [resolvable:$true] %s153
      %159 = dma.vmem_to_hbm [thread:$0]  %s154, 384, %s2, [#allocation4], 128, 128, 8
    $region17: #{tpu_custom_call.1} parent=1 // pred_fallthru
      _
    // Predicated region
    $region18: #{tpu_custom_call.1} parent=1 // pred_check
      _
    $region19: #{tpu_custom_call.1} parent=1 // pred_check_branch
      %161 = sbr.rel (0) target = $region21
    $region20: #{tpu_custom_call.1} parent=1 // pred_region
      %162 = dma.done [#allocation4], 384
    $region21: #{tpu_custom_call.1} parent=1 // pred_fallthru
      _
    %163 = vsyncpa [#allocation3], 1
    %164 = vsyncpa [#allocation4], 1

</llo_original>
